<compile_context>
chip_gen: v7x
topology: tpu7x:2x2x1
jax: 0.10.0
libtpu: 0.0.40
codegen_flags: <defaults>
</compile_context>

<pallas_src>
import jax
import jax.numpy as jnp
from jax.experimental import pallas as pl
from jax.experimental.pallas import tpu as pltpu

INPUT_SIZE = 500
INPUT_PAD = 512          # 500 rounded up to a multiple of 128
HIDDEN_SIZE = 256
OUTPUT_SIZE = 1


def _round_up(n, m):
    return ((n + m - 1) // m) * m


def _mlp_logsoftmax_kernel(x_ref, w1_ref, b1_ref, w3_ref, b3_ref, o_ref):
    # Layer 1: Linear(IN_PAD -> HID) + ReLU  (bf16 x bf16 -> f32 accumulate on MXU)
    h = jnp.dot(x_ref[...], w1_ref[...], preferred_element_type=jnp.float32)
    h = jnp.maximum(h + b1_ref[...], 0.0)

    # Layer 2: Linear(HID -> OUT)
    if OUTPUT_SIZE == 1:
        # N=1 matmul would waste the MXU; do VPU multiply + lane reduction.
        # w3_ref is the single weight row, shape (1, HIDDEN_SIZE).
        z = jnp.sum(h * w3_ref[...], axis=-1, keepdims=True) + b3_ref[...]
    else:
        # general case: contract h's last dim against w3's last dim
        z = jax.lax.dot_general(
            h, w3_ref[...], (((1,), (1,)), ((), ())),
            preferred_element_type=jnp.float32) + b3_ref[...]

    # log_softmax over the last dim (PyTorch F.log_softmax, dim=1 for 2-D input)
    if OUTPUT_SIZE == 1:
        # log_softmax of a single logit is exactly 0.0 for every input; skip
        # the transcendental chain entirely.
        # TODO(synk): if the caller actually wants raw logits (likely intent
        # for output_size=1), write `z` here instead.
        o_ref[...] = jnp.zeros_like(z).astype(o_ref.dtype)
    else:
        m = jnp.max(z, axis=-1, keepdims=True)
        lse = m + jnp.log(jnp.sum(jnp.exp(z - m), axis=-1, keepdims=True))
        o_ref[...] = (z - lse).astype(o_ref.dtype)


def network_forward(x, w1, b1, w3, b3, *, max_tile=128):
    """x: [B, INPUT_SIZE] float32 -> [B, OUTPUT_SIZE] float32 log-probabilities.

    w1: [INPUT_PAD, HIDDEN] bf16 (transposed + zero-padded vs PyTorch),
    b1: [1, HIDDEN] f32, w3: [OUTPUT_SIZE, HIDDEN] f32, b3: [1, OUTPUT_SIZE] f32.
    """
    B, in_dim = x.shape
    TB = min(max_tile, _round_up(B, 8))       # batch tile (sublane-aligned)
    B_pad = _round_up(B, TB)

    # Pad features 500 -> 512 and batch -> multiple of TB; cast x to bf16 to
    # match the bf16 MXU path (accumulation is still f32 in the kernel).
    x_p = jnp.pad(x.astype(jnp.bfloat16),
                  ((0, B_pad - B), (0, INPUT_PAD - in_dim)))

    out = pl.pallas_call(
        _mlp_logsoftmax_kernel,
        out_shape=jax.ShapeDtypeStruct((B_pad, OUTPUT_SIZE), jnp.float32),
        grid=(B_pad // TB,),
        in_specs=[
            pl.BlockSpec((TB, INPUT_PAD), lambda i: (i, 0)),            # x tile
            pl.BlockSpec((INPUT_PAD, HIDDEN_SIZE), lambda i: (0, 0)),   # w1 (resident)
            pl.BlockSpec((1, HIDDEN_SIZE), lambda i: (0, 0)),           # b1 (resident)
            pl.BlockSpec((OUTPUT_SIZE, HIDDEN_SIZE), lambda i: (0, 0)), # w3 (resident)
            pl.BlockSpec((1, OUTPUT_SIZE), lambda i: (0, 0)),           # b3 (resident)
        ],
        out_specs=pl.BlockSpec((TB, OUTPUT_SIZE), lambda i: (i, 0)),
        compiler_params=pltpu.CompilerParams(
            dimension_semantics=("parallel",)),
    )(x_p, w1, b1, w3, b3)
    return out[:B]


def normalized_columns_initializer(key, shape, std=1.0):
    """PyTorch init: randn normalized per output row, scaled by std.

    `shape` follows the PyTorch weight convention [out_features, in_features].
    """
    w = jax.random.normal(key, shape, dtype=jnp.float32)
    w = w * (std / jnp.sqrt(jnp.sum(w * w, axis=1, keepdims=True)))
    return w


def init_params(key):
    k1, k3 = jax.random.split(key)
    w1_pt = normalized_columns_initializer(k1, (HIDDEN_SIZE, INPUT_SIZE), std=0.01)
    w3_pt = normalized_columns_initializer(k3, (OUTPUT_SIZE, HIDDEN_SIZE), std=0.01)

    # Kernel layout: w1 transposed to [IN, HID], zero-padded to [IN_PAD, HID], bf16.
    w1 = jnp.zeros((INPUT_PAD, HIDDEN_SIZE), jnp.float32)
    w1 = w1.at[:INPUT_SIZE].set(w1_pt.T).astype(jnp.bfloat16)
    b1 = jnp.zeros((1, HIDDEN_SIZE), jnp.float32)
    w3 = w3_pt                                   # [OUT, HID] f32 (row-broadcast in kernel)
    b3 = jnp.zeros((1, OUTPUT_SIZE), jnp.float32)
    return w1, b1, w3, b3


def reference_forward(x, w1, b1, w3, b3):
    """Pure-JAX f32 reference using the same stored parameters."""
    w1f = w1.astype(jnp.float32)[:INPUT_SIZE]    # [IN, HID]
    h = jnp.maximum(x @ w1f + b1, 0.0)
    z = h @ w3.T + b3
    return jax.nn.log_softmax(z, axis=-1)


if __name__ == "__main__":
    key = jax.random.PRNGKey(0)
    k_params, k_x = jax.random.split(key)
    w1, b1, w3, b3 = init_params(k_params)

    batch = 8
    x = jax.random.normal(k_x, (batch, INPUT_SIZE), dtype=jnp.float32)

    out = network_forward(x, w1, b1, w3, b3)
    out = jax.block_until_ready(out)

    ref = reference_forward(x, w1, b1, w3, b3)
    assert out.shape == (batch, OUTPUT_SIZE)
    assert jnp.allclose(out, ref, atol=1e-5, rtol=1e-5)

    print("KERNEL_OK")
</pallas_src>

<mosaic_0001>
module attributes {stable_mosaic.version = 11 : i64} {
  func.func @_mlp_logsoftmax_kernel(%arg0: i32, %arg1: memref<8x512xbf16, #tpu.memory_space<vmem>>, %arg2: memref<512x256xbf16, #tpu.memory_space<vmem>>, %arg3: memref<1x256xf32, #tpu.memory_space<vmem>>, %arg4: memref<1x256xf32, #tpu.memory_space<vmem>>, %arg5: memref<1x1xf32, #tpu.memory_space<vmem>>, %arg6: memref<8x1xf32, #tpu.memory_space<vmem>>) attributes {dimension_semantics = [#tpu.dimension_semantics<parallel>], iteration_bounds = array<i64: 1>, scalar_prefetch = 0 : i64, scratch_operands = 0 : i64, tpu.core_type = #tpu.core_type<tc>, window_params = [{transform_indices = @transform_0, window_bounds = array<i64: 8, 512>}, {pipeline_mode = #tpu.pipeline_mode<synchronous>, transform_indices = @transform_1, window_bounds = array<i64: 512, 256>}, {pipeline_mode = #tpu.pipeline_mode<synchronous>, transform_indices = @transform_2, window_bounds = array<i64: 1, 256>}, {pipeline_mode = #tpu.pipeline_mode<synchronous>, transform_indices = @transform_3, window_bounds = array<i64: 1, 256>}, {pipeline_mode = #tpu.pipeline_mode<synchronous>, transform_indices = @transform_4, window_bounds = array<i64: 1, 1>}, {transform_indices = @transform_5, window_bounds = array<i64: 8, 1>}]} {
    %cst = arith.constant 0.000000e+00 : f32
    %0 = vector.broadcast %cst : f32 to vector<8x1xf32>
    %c0 = arith.constant 0 : index
    %c0_0 = arith.constant 0 : index
    %1 = vector.load %arg6[%c0, %c0_0] : memref<8x1xf32, #tpu.memory_space<vmem>>, vector<8x1xf32>
    tpu.vector_store %arg6[%c0, %c0_0], %0 {strides = array<i32>} : memref<8x1xf32, #tpu.memory_space<vmem>>, vector<8x1xf32>,
    return
  }
  func.func @transform_0(%arg0: i32) -> (i32, i32) {
    %c0_i32 = arith.constant 0 : i32
    %c0_i32_0 = arith.constant 0 : i32
    return %arg0, %c0_i32 : i32, i32
  }
  func.func @transform_1(%arg0: i32) -> (i32, i32) {
    %c0_i32 = arith.constant 0 : i32
    %c0_i32_0 = arith.constant 0 : i32
    %c0_i32_1 = arith.constant 0 : i32
    return %c0_i32, %c0_i32_0 : i32, i32
  }
  func.func @transform_2(%arg0: i32) -> (i32, i32) {
    %c0_i32 = arith.constant 0 : i32
    %c0_i32_0 = arith.constant 0 : i32
    %c0_i32_1 = arith.constant 0 : i32
    return %c0_i32, %c0_i32_0 : i32, i32
  }
  func.func @transform_3(%arg0: i32) -> (i32, i32) {
    %c0_i32 = arith.constant 0 : i32
    %c0_i32_0 = arith.constant 0 : i32
    %c0_i32_1 = arith.constant 0 : i32
    return %c0_i32, %c0_i32_0 : i32, i32
  }
  func.func @transform_4(%arg0: i32) -> (i32, i32) {
    %c0_i32 = arith.constant 0 : i32
    %c0_i32_0 = arith.constant 0 : i32
    %c0_i32_1 = arith.constant 0 : i32
    return %c0_i32, %c0_i32_0 : i32, i32
  }
  func.func @transform_5(%arg0: i32) -> (i32, i32) {
    %c0_i32 = arith.constant 0 : i32
    %c0_i32_0 = arith.constant 0 : i32
    return %arg0, %c0_i32 : i32, i32
  }
}

</mosaic_0001>

<llo_original>
// kernel: tpu_custom_call.1
$region0: #{tpu_custom_call.1}
  #allocation0 [shape = 'u32[]', space=smem, size = 0x4, offset = 0x4, fixed_abs, tag = 'smem constant byte address 0x4 - core index']
  #allocation1 [shape = 'u32[144,128]{1,0:T(1,128)}', space=vmem, size = 0x12000, scoped, tag = 'internal scratch']
  #allocation2 [shape = 'f32[1,1]{1,0:T(1,128)S(1)}', space=vmem, size = 0x200, scoped, tag = 'scoped memory for tpu_custom_call.1']
  %s0 = inlined_call_operand.hbm [shape: bf16[8,512], index: 0, kind: input, shape index: {}]
  %s1 = inlined_call_operand.hbm [shape: bf16[512,256], index: 1, kind: input, shape index: {}]
  %s2 = inlined_call_operand.vmem [shape: f32[1,256], index: 2, kind: input, shape index: {}]
  %s3 = inlined_call_operand.vmem [shape: f32[1,256], index: 3, kind: input, shape index: {}]
  %s4 = inlined_call_operand.<no memory space> [shape: f32[1,1], index: 4, kind: input, shape index: {}]
  %s5 = inlined_call_operand.vmem [shape: f32[8,1], index: 5, kind: output, shape index: {}]
  %s6 = sld [smem:[#allocation0]]
  $region38: #{tpu_custom_call.1} parent=0
    _
  %s8 = ssub.s32 1, %s6
  %s9 = scalar_select 0, %s8, %s6
  %v10 = vstv %s4
  %11 = vst [vmem:[#allocation2] sm:$0x1] %v10
  $region1: #{tpu_custom_call.1} parent=0
    #allocation3 [shape = 'u8[8192]{0}', space=vmem, size = 0x2000, scoped, tag = 'input window, operand 0, single buffered']
    #allocation4 [shape = 's32[1]{0}', space=sflag, size = 0x4, scoped, tag = 'scoped memory for tpu_custom_call.1']
    #allocation5 [shape = 'u8[262144]{0}', space=vmem, size = 0x40000, scoped, tag = 'input window, operand 1, single buffered']
    #allocation6 [shape = 's32[1]{0}', space=sflag, size = 0x4, scoped, tag = 'scoped memory for tpu_custom_call.1']
    %12 = vsyncpa [#allocation4], 0
    %13 = vsyncpa [#allocation6], 0
    // Predicated region
    $region2: #{tpu_custom_call.1} parent=1 // pred_check
      _
    $region3: #{tpu_custom_call.1} parent=1 // pred_check_branch
      %15 = sbr.rel (0) target = $region5
    $region4: #{tpu_custom_call.1} parent=1 // pred_region
      %s17 = ssub.s32 256, 256
      %18 = vsyncadd [#allocation4], %s17
      %s20 = sshll.u32 [#allocation3], 4
      %s21 = int_to_ptr.vmem [resolvable:$true] %s20
      %23 = dma.hbm_to_vmem [thread:$0]  %s0, 256, %s21, [#allocation4]
    $region5: #{tpu_custom_call.1} parent=1 // pred_fallthru
      _
    // Predicated region
    $region6: #{tpu_custom_call.1} parent=1 // pred_check
      _
    $region7: #{tpu_custom_call.1} parent=1 // pred_check_branch
      %25 = sbr.rel (0) target = $region9
    $region8: #{tpu_custom_call.1} parent=1 // pred_region
      %s27 = ssub.s32 8192, 8192
      %28 = vsyncadd [#allocation6], %s27
      %s29 = sshll.u32 [#allocation5], 4
      %s30 = int_to_ptr.vmem [resolvable:$true] %s29
      %35 = dma.hbm_to_vmem [thread:$0]  %s1, 8192, %s30, [#allocation6], 128, 128, 8
    $region9: #{tpu_custom_call.1} parent=1 // pred_fallthru
      _
    // Predicated region
    $region10: #{tpu_custom_call.1} parent=1 // pred_check
      _
    $region11: #{tpu_custom_call.1} parent=1 // pred_check_branch
      %37 = sbr.rel (0) target = $region13
    $region12: #{tpu_custom_call.1} parent=1 // pred_region
      _
    $region13: #{tpu_custom_call.1} parent=1 // pred_fallthru
      _
    // Predicated region
    $region14: #{tpu_custom_call.1} parent=1 // pred_check
      _
    $region15: #{tpu_custom_call.1} parent=1 // pred_check_branch
      %39 = sbr.rel (0) target = $region17
    $region16: #{tpu_custom_call.1} parent=1 // pred_region
      _
    $region17: #{tpu_custom_call.1} parent=1 // pred_fallthru
      _
    // Predicated region
    $region18: #{tpu_custom_call.1} parent=1 // pred_check
      _
    $region19: #{tpu_custom_call.1} parent=1 // pred_check_branch
      %41 = sbr.rel (0) target = $region21
    $region20: #{tpu_custom_call.1} parent=1 // pred_region
      _
    $region21: #{tpu_custom_call.1} parent=1 // pred_fallthru
      _
    // Predicated region
    $region22: #{tpu_custom_call.1} parent=1 // pred_check
      _
    $region23: #{tpu_custom_call.1} parent=1 // pred_check_branch
      %43 = sbr.rel (0) target = $region25
    $region24: #{tpu_custom_call.1} parent=1 // pred_region
      %44 = dma.done [#allocation4], 256
    $region25: #{tpu_custom_call.1} parent=1 // pred_fallthru
      _
    // Predicated region
    $region26: #{tpu_custom_call.1} parent=1 // pred_check
      _
    $region27: #{tpu_custom_call.1} parent=1 // pred_check_branch
      %46 = sbr.rel (0) target = $region29
    $region28: #{tpu_custom_call.1} parent=1 // pred_region
      %47 = dma.done [#allocation6], 8192
    $region29: #{tpu_custom_call.1} parent=1 // pred_fallthru
      _
    %vm48 = vcmask 7168
    %49 = vst.msk [vmem:[%s5] sm:$0xff] %vm48, 0.0
    // Predicated region
    $region30: #{tpu_custom_call.1} parent=1 // pred_check
      _
    $region31: #{tpu_custom_call.1} parent=1 // pred_check_branch
      %51 = sbr.rel (0) target = $region33
    $region32: #{tpu_custom_call.1} parent=1 // pred_region
      _
    $region33: #{tpu_custom_call.1} parent=1 // pred_fallthru
      _
    // Predicated region
    $region34: #{tpu_custom_call.1} parent=1 // pred_check
      _
    $region35: #{tpu_custom_call.1} parent=1 // pred_check_branch
      %53 = sbr.rel (0) target = $region37
    $region36: #{tpu_custom_call.1} parent=1 // pred_region
      _
    $region37: #{tpu_custom_call.1} parent=1 // pred_fallthru
      _
    %54 = vsyncpa [#allocation4], 1
    %55 = vsyncpa [#allocation6], 1

</llo_original>
